<compile_context>
chip_gen: v5e
topology: v5e:2x2
jax: 0.10.0
libtpu: 0.0.40
codegen_flags: <defaults>
</compile_context>

<pallas_src>
import functools

import jax
import jax.numpy as jnp
from jax.experimental import pallas as pl
from jax.experimental.pallas import tpu as pltpu

_LANES = 128
_MIN_PALLAS_BYTES = 128 << 10     # below this, plain JAX is strictly faster
_MEGACORE_MIN_BYTES = 512 << 10   # above this, force >= 2 balanced grid steps

_IDENTITY = lambda x: x  # noqa: E731  (module default, used for short-circuit)


def _lambda_kernel(x_ref, o_ref, *, lam):
    # Elementwise hot path: apply the traced lambda to the whole VMEM tile.
    o_ref[...] = lam(x_ref[...]).astype(o_ref.dtype)


def _sublane_pack(dtype):
    return {4: 8, 2: 16, 1: 32}.get(jnp.dtype(dtype).itemsize, 8)


@functools.lru_cache(maxsize=None)
def _chip_block_bytes():
    """Per-chip byte target for one input block."""
    names = []
    try:
        info = pltpu.get_tpu_info()
        for attr in ("chip_version", "chip_name", "name"):
            val = getattr(info, attr, None)
            if val is not None:
                names.append(str(val).lower())
    except Exception:
        pass
    try:
        names.append(jax.devices()[0].device_kind.lower())
    except Exception:
        pass
    blob = " ".join(names)
    if "v7" in blob:
        return 4 << 20   # per-TC HBM ~3.2+ TB/s: bigger blocks to pass roofline knee
    if "v6" in blob:
        return 2 << 20   # measured ~86% roofline; fits 32 MiB scoped budget easily
    if "v5" in blob:
        return 1 << 20   # 16 MiB scoped default, ~0.82 TB/s: 1 MiB already past knee
    return 2 << 20


def _choose_blocking(rows, in_dtype, out_dtype, total_in_bytes):
    """Pick (block_rows, grid_steps): balanced, sublane-aligned, megacore-friendly."""
    sub = max(_sublane_pack(in_dtype), _sublane_pack(out_dtype))
    if rows <= sub:
        return rows, 1  # single full-extent block (always legal)

    itemsize = jnp.dtype(in_dtype).itemsize
    target_rows = _chip_block_bytes() // (_LANES * itemsize)
    target_rows = max(sub, (target_rows // sub) * sub)

    num_blocks = pl.cdiv(rows, target_rows)
    if total_in_bytes >= _MEGACORE_MIN_BYTES:
        # Guarantee an even number of >=2 grid steps so ("parallel",)
        # dimension semantics can shard the grid across both v7x TensorCores
        # with a balanced split (no tiny tail block).
        if num_blocks < 2:
            num_blocks = 2
        elif num_blocks % 2:
            num_blocks += 1
    num_blocks = max(1, min(num_blocks, pl.cdiv(rows, sub)))

    if num_blocks == 1:
        return rows, 1

    block_rows = -(-rows // num_blocks)                  # balanced split
    block_rows = ((block_rows + sub - 1) // sub) * sub   # sublane aligned
    grid = pl.cdiv(rows, block_rows)
    if grid == 1:
        block_rows = rows  # degenerate: fall back to a single full block
    return block_rows, grid


def _cost_estimate(lam, shape, in_dtype, out_dtype, n):
    bytes_accessed = n * (jnp.dtype(in_dtype).itemsize +
                          jnp.dtype(out_dtype).itemsize)
    try:
        ce = pl.estimate_cost(lam, jax.ShapeDtypeStruct(shape, in_dtype))
        return pl.CostEstimate(flops=int(ce.flops),
                               transcendentals=int(ce.transcendentals),
                               bytes_accessed=bytes_accessed)
    except Exception:
        return pl.CostEstimate(flops=n, transcendentals=0,
                               bytes_accessed=bytes_accessed)


def _run_elementwise(x2d, lam, out_dtype, donate):
    rows, cols = x2d.shape
    in_itemsize = jnp.dtype(x2d.dtype).itemsize
    out_itemsize = jnp.dtype(out_dtype).itemsize
    total_in_bytes = rows * cols * in_itemsize

    block_rows, grid_steps = _choose_blocking(rows, x2d.dtype, out_dtype,
                                              total_in_bytes)

    # Double-buffered pipeline: 2 x (input block + output block).
    buf_bytes = 2 * block_rows * cols * (in_itemsize + out_itemsize)
    compiler_kwargs = dict(dimension_semantics=("parallel",))
    if buf_bytes > (12 << 20):
        # Keep headroom above the scoped VMEM default (16/32 MiB depending on
        # generation); physical VMEM (64-128 MiB) has plenty of room.
        compiler_kwargs["vmem_limit_bytes"] = min(buf_bytes + (8 << 20), 56 << 20)

    call_kwargs = {}
    if donate and out_dtype == x2d.dtype:
        # Alias input/output HBM only when the caller says the input is dead;
        # unconditional aliasing either clobbers a live buffer or forces XLA
        # to insert a defensive full copy.
        call_kwargs["input_output_aliases"] = {0: 0}

    n = rows * cols
    cost = _cost_estimate(lam, (rows, cols), x2d.dtype, out_dtype, n)

    return pl.pallas_call(
        functools.partial(_lambda_kernel, lam=lam),
        out_shape=jax.ShapeDtypeStruct((rows, cols), out_dtype),
        grid=(grid_steps,),
        in_specs=[pl.BlockSpec((block_rows, cols), lambda i: (i, 0))],
        out_specs=pl.BlockSpec((block_rows, cols), lambda i: (i, 0)),
        compiler_params=pltpu.CompilerParams(**compiler_kwargs),
        cost_estimate=cost,
        **call_kwargs,
    )(x2d)


def nn_lambda(x, lam=_IDENTITY, *, donate=False,
              min_pallas_bytes=_MIN_PALLAS_BYTES):
    """Pallas equivalent of nnLambda(lam)(x) for elementwise lambdas.

    donate=True allows the input HBM buffer to be aliased with the output
    (only safe when the caller no longer needs x).
    """
    # Default nnLambda is the identity: no work at all.
    if lam is _IDENTITY:
        return x

    x = jnp.asarray(x)

    # Output dtype / shape from abstract evaluation of the lambda.
    try:
        out_aval = jax.eval_shape(lam, jax.ShapeDtypeStruct(x.shape, x.dtype))
    except Exception:
        return lam(x)
    if not hasattr(out_aval, "shape") or out_aval.shape != x.shape:
        # TODO(synk): shape-changing / multi-arg lambdas are arbitrary Python
        # and have no generic single-kernel Pallas lowering; fall back.
        return lam(x)
    out_dtype = out_aval.dtype

    n = x.size
    if n == 0:
        return lam(x)
    if n * jnp.dtype(x.dtype).itemsize < min_pallas_bytes:
        # Tiny tensors: fixed pallas_call + per-step overhead dominates; XLA's
        # fused elementwise op is strictly faster.
        return lam(x)

    orig_shape = x.shape
    cols = _LANES

    if n % cols == 0:
        # Aligned fast path: reshape to a lane-dense slab is a free bitcast.
        out2d = _run_elementwise(x.reshape(n // cols, cols), lam, out_dtype,
                                 donate)
        return out2d.reshape(orig_shape)

    # Ragged total size: run the kernel on the aligned prefix and evaluate the
    # (<128 element) tail in plain JAX -- no full-array pad/slice round trips.
    x_flat = x.reshape(-1)
    aligned = (n // cols) * cols
    out_prefix = _run_elementwise(x_flat[:aligned].reshape(aligned // cols, cols),
                                  lam, out_dtype, donate=False)
    out_tail = lam(x_flat[aligned:]).astype(out_dtype)
    return jnp.concatenate([out_prefix.reshape(-1), out_tail]).reshape(orig_shape)


if __name__ == "__main__":
    key = jax.random.PRNGKey(0)

    # Small NCHW input consistent with a typical use of the module.
    x = jax.random.normal(key, (2, 4, 16, 16), dtype=jnp.float32)

    # 1) Default nnLambda: identity (short-circuit, no kernel launch).
    y_identity = jax.block_until_ready(nn_lambda(x))
    assert y_identity.shape == x.shape and y_identity.dtype == x.dtype
    assert jnp.allclose(y_identity, x), "identity lambda mismatch"

    # 2) Small-tensor path: elementwise lambda takes the plain-JAX fallback.
    lam = lambda t: jnp.tanh(t) * 2.0 + 1.0
    y_small = jax.block_until_ready(nn_lambda(x, lam))
    assert jnp.allclose(y_small, lam(x), atol=1e-6), "small fallback mismatch"

    # 3) Same small tensor, forced through the Pallas kernel path.
    y_kernel = jax.block_until_ready(nn_lambda(x, lam, min_pallas_bytes=0))
    assert jnp.allclose(y_kernel, lam(x), atol=1e-6), "kernel lambda mismatch"

    # 4) bf16 multi-block slab: exercises grid > 1, dtype-aware sublane
    #    rounding and the megacore (>= 2 even grid steps) split.
    xb = jax.random.normal(key, (8, 64, 64, 64), dtype=jnp.bfloat16)
    y_b = jax.block_until_ready(nn_lambda(xb, lam))
    assert y_b.shape == xb.shape and y_b.dtype == xb.dtype
    assert jnp.allclose(y_b.astype(jnp.float32),
                        lam(xb).astype(jnp.float32),
                        atol=3e-2), "bf16 lambda mismatch"

    # 5) Ragged total size (n % 128 != 0): aligned-prefix kernel + JAX tail.
    xr = jax.random.normal(key, (3, 67, 129), dtype=jnp.float32)
    y_r = jax.block_until_ready(nn_lambda(xr, lam, min_pallas_bytes=0))
    assert jnp.allclose(y_r, lam(xr), atol=1e-6), "ragged lambda mismatch"

    # 6) Opt-in donation of a fresh temporary (dtype-preserving lambda).
    lam_scale = lambda t: t * 0.5
    xt = x * 3.0
    y_d = jax.block_until_ready(
        nn_lambda(xt, lam_scale, donate=True, min_pallas_bytes=0))
    assert jnp.allclose(y_d, x * 1.5, atol=1e-6), "donated lambda mismatch"

    print("KERNEL_OK")
</pallas_src>

<mosaic_0001>
module attributes {stable_mosaic.version = 11 : i64} {
  func.func @_lambda_kernel(%arg0: i32, %arg1: memref<16x128xf32, #tpu.memory_space<vmem>>, %arg2: memref<16x128xf32, #tpu.memory_space<vmem>>) attributes {dimension_semantics = [#tpu.dimension_semantics<parallel>], iteration_bounds = array<i64: 1>, scalar_prefetch = 0 : i64, scratch_operands = 0 : i64, tpu.core_type = #tpu.core_type<tc>, window_params = [{transform_indices = @transform_0, window_bounds = array<i64: 16, 128>}, {transform_indices = @transform_1, window_bounds = array<i64: 16, 128>}]} {
    %c0 = arith.constant 0 : index
    %c0_0 = arith.constant 0 : index
    %0 = vector.load %arg1[%c0, %c0_0] : memref<16x128xf32, #tpu.memory_space<vmem>>, vector<16x128xf32>
    %1 = math.tanh %0 : vector<16x128xf32>
    %cst = arith.constant 2.000000e+00 : f32
    %2 = vector.broadcast %cst : f32 to vector<16x128xf32>
    %3 = arith.mulf %1, %2 : vector<16x128xf32>
    %cst_1 = arith.constant 1.000000e+00 : f32
    %4 = vector.broadcast %cst_1 : f32 to vector<16x128xf32>
    %5 = arith.addf %3, %4 : vector<16x128xf32>
    %c0_2 = arith.constant 0 : index
    %c0_3 = arith.constant 0 : index
    %6 = vector.load %arg2[%c0_2, %c0_3] : memref<16x128xf32, #tpu.memory_space<vmem>>, vector<16x128xf32>
    tpu.vector_store %arg2[%c0_2, %c0_3], %5 {strides = array<i32>} : memref<16x128xf32, #tpu.memory_space<vmem>>, vector<16x128xf32>,
    return
  }
  func.func @transform_0(%arg0: i32) -> (i32, i32) {
    %c0_i32 = arith.constant 0 : i32
    %c0_i32_0 = arith.constant 0 : i32
    return %arg0, %c0_i32 : i32, i32
  }
  func.func @transform_1(%arg0: i32) -> (i32, i32) {
    %c0_i32 = arith.constant 0 : i32
    %c0_i32_0 = arith.constant 0 : i32
    return %arg0, %c0_i32 : i32, i32
  }
}

</mosaic_0001>

<llo_original>
// kernel: tpu_custom_call.1
$region0: #{tpu_custom_call.1}
  #allocation0 [shape = 'u32[]', space=smem, size = 0x4, offset = 0x4, fixed_abs, tag = 'smem constant byte address 0x4 - core index']
  #allocation1 [shape = 'u32[72,128]{1,0:T(1,128)}', space=vmem, size = 0x9000, scoped, tag = 'internal scratch']
  %s0 = inlined_call_operand.hbm [shape: f32[16,128], index: 0, kind: input, shape index: {}]
  %s1 = inlined_call_operand.hbm [shape: f32[16,128], index: 1, kind: output, shape index: {}]
  %s2 = sld [smem:[#allocation0]]
  $region18: #{tpu_custom_call.1} parent=0
    _
  %s4 = ssub.s32 1, %s2
  %s5 = scalar_select 0, %s4, %s2
  $region1: #{tpu_custom_call.1} parent=0
    #allocation2 [shape = 'u8[8192]{0}', space=vmem, size = 0x2000, scoped, tag = 'input window, operand 0, single buffered']
    #allocation3 [shape = 's32[1]{0}', space=sflag, size = 0x4, scoped, tag = 'scoped memory for tpu_custom_call.1']
    #allocation4 [shape = 's32[1]{0}', space=sflag, size = 0x4, scoped, tag = 'scoped memory for tpu_custom_call.1']
    #allocation5 [shape = 'u8[8192]{0}', space=vmem, size = 0x2000, scoped, tag = 'output window, operand 0, single buffered']
    %6 = vsyncpa [#allocation3], 0
    %7 = vsyncpa [#allocation4], 0
    // Predicated region
    $region2: #{tpu_custom_call.1} parent=1 // pred_check
      _
    $region3: #{tpu_custom_call.1} parent=1 // pred_check_branch
      %9 = sbr.rel (0) target = $region5
    $region4: #{tpu_custom_call.1} parent=1 // pred_region
      %11 = vsyncadd [#allocation3], 0
      %s12 = sshll.u32 %s0, 4
      %s13 = int_to_ptr.hbm [resolvable:$true] %s12
      %s14 = sshll.u32 [#allocation2], 4
      %s15 = int_to_ptr.vmem [resolvable:$true] %s14
      %20 = dma.hbm_to_vmem [thread:$0]  %s13, 256, %s15, [#allocation3], 128, 128, 8
    $region5: #{tpu_custom_call.1} parent=1 // pred_fallthru
      _
    // Predicated region
    $region6: #{tpu_custom_call.1} parent=1 // pred_check
      _
    $region7: #{tpu_custom_call.1} parent=1 // pred_check_branch
      %22 = sbr.rel (0) target = $region9
    $region8: #{tpu_custom_call.1} parent=1 // pred_region
      %24 = dma.done [#allocation3], 256
    $region9: #{tpu_custom_call.1} parent=1 // pred_fallthru
      _
    %v25 = vld [vmem:[#allocation2] sm:$0xff]
    %v26 = vld [vmem:[#allocation2 + $0x8] sm:$0xff]
    %v27 = vtanh.pop %v25
    %v28 = vtanh.pop %v26
    %v29 = vmul.f32 %v27, 2.0
    %v30 = vmul.f32 %v28, 2.0
    %v31 = vadd.f32 %v29, 1.0
    %v32 = vadd.f32 %v30, 1.0
    %33 = vst [vmem:[#allocation5] sm:$0xff] %v31
    %34 = vst [vmem:[#allocation5 + $0x8] sm:$0xff] %v32
    // Predicated region
    $region10: #{tpu_custom_call.1} parent=1 // pred_check
      _
    $region11: #{tpu_custom_call.1} parent=1 // pred_check_branch
      %36 = sbr.rel (0) target = $region13
    $region12: #{tpu_custom_call.1} parent=1 // pred_region
      %38 = vsyncadd [#allocation4], 0
      %s39 = sshll.u32 [#allocation5], 4
      %s40 = int_to_ptr.vmem [resolvable:$true] %s39
      %s41 = sshll.u32 %s1, 4
      %s42 = int_to_ptr.hbm [resolvable:$true] %s41
      %47 = dma.vmem_to_hbm [thread:$0]  %s40, 256, %s42, [#allocation4], 128, 128, 8
    $region13: #{tpu_custom_call.1} parent=1 // pred_fallthru
      _
    // Predicated region
    $region14: #{tpu_custom_call.1} parent=1 // pred_check
      _
    $region15: #{tpu_custom_call.1} parent=1 // pred_check_branch
      %49 = sbr.rel (0) target = $region17
    $region16: #{tpu_custom_call.1} parent=1 // pred_region
      %51 = dma.done [#allocation4], 256
    $region17: #{tpu_custom_call.1} parent=1 // pred_fallthru
      _
    %52 = vsyncpa [#allocation3], 1
    %53 = vsyncpa [#allocation4], 1

</llo_original>
